<compile_context>
chip_gen: v6e
topology: v6e:2x2x1
jax: 0.10.0
libtpu: 0.0.40
codegen_flags: <defaults>
</compile_context>

<pallas_src>
import functools
import math

import jax
import jax.numpy as jnp
from jax.experimental import pallas as pl
from jax.experimental.pallas import tpu as pltpu


# Large finite negative fill: behaves like -inf under softmax but cannot
# produce NaN for fully-masked rows.
_MASK_FILL = -1e30


def sdpa_kernel(*refs, scale, has_mask, return_attention):
    """One (batch*head, q-tile) step: full-Lk scores, softmax, context."""
    q_ref, k_ref, v_ref = refs[0], refs[1], refs[2]
    mask_ref = refs[3] if has_mask else None
    out_at = 3 + int(has_mask)
    ctx_ref = refs[out_at]
    attn_ref = refs[out_at + 1] if return_attention else None

    q = q_ref[0]                                   # [TQ, Dk] bf16
    if scale:                                      # mirror PyTorch `if scale:`
        q = q * jnp.asarray(scale, dtype=q.dtype)  # fold scale into Q once
    k = k_ref[0]                                   # [LK, Dk] bf16
    v = v_ref[0]                                   # [LK, Dv] bf16

    # scores [TQ, LK]: contract last dim of both operands (Q.K^T with no
    # explicit transpose / XLU relayout), bf16 MXU with f32 accumulation.
    s = jax.lax.dot_general(
        q, k,
        dimension_numbers=(((1,), (1,)), ((), ())),
        preferred_element_type=jnp.float32)

    if has_mask:
        # int8 0/1 mask, additive large-negative bias (single VPU add).
        s = s + mask_ref[0, 0].astype(jnp.float32) * jnp.float32(_MASK_FILL)

    # Numerically stable softmax in f32; the divide goes to the EUP slot.
    s = s - jnp.max(s, axis=-1, keepdims=True)
    e = jnp.exp(s)
    attn = e * pl.reciprocal(jnp.sum(e, axis=-1, keepdims=True), approx=True)

    # TODO(synk): attention dropout is identity (p=0.0 / eval mode); no RNG path.
    if return_attention:
        attn_ref[0] = attn.astype(attn_ref.dtype)

    # context [TQ, Dv] = attn @ V, bf16 MXU / f32 accumulation.
    ctx = jax.lax.dot_general(
        attn.astype(v.dtype), v,
        dimension_numbers=(((1,), (0,)), ((), ())),
        preferred_element_type=jnp.float32)
    ctx_ref[0] = ctx.astype(ctx_ref.dtype)


def _q_tile_target():
    """Generation-aware query-tile target (VMEM-aware)."""
    try:
        kind = jax.devices()[0].device_kind.lower()
    except Exception:
        return 256
    if "v6" in kind:
        return 512
    if "v5e" in kind or "v5 lite" in kind or "v5litepod" in kind:
        return 128
    if "v7" in kind:
        return 256
    return 256


def _pick_q_tile(l_q, target):
    """Largest tile <= target dividing l_q, preferring x128, then x16, then x8.

    If no clean divisor exists the caller pads Lq up to a multiple of the
    returned (multiple-of-128) tile instead of using the full length.
    """
    if l_q <= target:
        return l_q
    for step in (128, 16, 8):
        base = max(step, (target // step) * step)
        for t in range(base, step - 1, -step):
            if l_q % t == 0:
                return t
    return max(128, (target // 128) * 128)


def scale_dot_product_attention(q, k, v, scale=None, attn_mask=None,
                                q_tile=None, return_attention=True):
    B, H, Lq, Dk = q.shape
    Lk = k.shape[2]
    Dv = v.shape[3]
    BH = B * H
    out_dtype = q.dtype

    if q_tile is None:
        q_tile = _pick_q_tile(Lq, _q_tile_target())
    n_q = math.ceil(Lq / q_tile)
    lq_p = n_q * q_tile
    pad = lq_p - Lq

    # bf16 inputs: halves Q/K/V HBM traffic and VMEM residency; all matmuls
    # run on the MXU in bf16 with f32 accumulation anyway.
    qf = q.astype(jnp.bfloat16).reshape(BH, Lq, Dk)
    kf = k.astype(jnp.bfloat16).reshape(BH, Lk, Dk)
    vf = v.astype(jnp.bfloat16).reshape(BH, Lk, Dv)
    if pad:
        qf = jnp.pad(qf, ((0, 0), (0, pad), (0, 0)))

    has_mask = attn_mask is not None
    inputs = [qf, kf, vf]
    in_specs = [
        pl.BlockSpec((1, q_tile, Dk), lambda bh, qi: (bh, qi, 0)),
        pl.BlockSpec((1, Lk, Dk), lambda bh, qi: (bh, 0, 0)),
        pl.BlockSpec((1, Lk, Dv), lambda bh, qi: (bh, 0, 0)),
    ]

    mask_bytes = 0
    if has_mask:
        m = attn_mask
        if m.ndim == 2:
            m = m[None, None]
        elif m.ndim != 4:
            raise ValueError(f"attn_mask must be 2-D or 4-D, got {m.shape}")
        # int8 0/1 mask: 1 byte/elem, no head broadcast in HBM.
        m = (m != 0).astype(jnp.int8)
        if pad:
            m = jnp.pad(m, ((0, 0), (0, 0), (0, pad), (0, 0)))
        mb, mh = m.shape[0], m.shape[1]
        mask_bytes = int(math.prod(m.shape))

        def mask_map(bh, qi, _mb=mb, _mh=mh, _h=H):
            b_idx = 0 if _mb == 1 else bh // _h
            h_idx = 0 if _mh == 1 else bh % _h
            return (b_idx, h_idx, qi, 0)

        in_specs.append(pl.BlockSpec((1, 1, q_tile, Lk), mask_map))
        inputs.append(m)

    out_shapes = [jax.ShapeDtypeStruct((BH, lq_p, Dv), out_dtype)]
    out_specs = [pl.BlockSpec((1, q_tile, Dv), lambda bh, qi: (bh, qi, 0))]
    if return_attention:
        out_shapes.append(jax.ShapeDtypeStruct((BH, lq_p, Lk), out_dtype))
        out_specs.append(pl.BlockSpec((1, q_tile, Lk), lambda bh, qi: (bh, qi, 0)))

    # Explicit VMEM budget: 2x buffers per spec on the actual block bytes,
    # with headroom; clamped well below physical VMEM on all generations.
    itm = jnp.dtype(out_dtype).itemsize
    blk_bytes = (q_tile * Dk * 2 + Lk * Dk * 2 + Lk * Dv * 2
                 + (q_tile * Lk if has_mask else 0)
                 + q_tile * Dv * itm
                 + (q_tile * Lk * itm if return_attention else 0))
    vmem_limit = int(min(max(3 * blk_bytes + (1 << 20), 16 << 20), 100 << 20))

    cost = pl.CostEstimate(
        flops=2 * BH * Lq * Lk * (Dk + Dv),
        transcendentals=BH * Lq * Lk,
        bytes_accessed=(2 * (BH * Lq * Dk + BH * Lk * Dk + BH * Lk * Dv)
                        + mask_bytes
                        + BH * Lq * Dv * itm
                        + (BH * Lq * Lk * itm if return_attention else 0)))

    kernel = functools.partial(
        sdpa_kernel, scale=scale, has_mask=has_mask,
        return_attention=return_attention)

    outs = pl.pallas_call(
        kernel,
        grid=(BH, lq_p // q_tile),
        in_specs=in_specs,
        out_specs=tuple(out_specs),
        out_shape=tuple(out_shapes),
        compiler_params=pltpu.CompilerParams(
            dimension_semantics=("parallel", "parallel"),
            vmem_limit_bytes=vmem_limit),
        cost_estimate=cost,
    )(*inputs)

    ctx = outs[0].reshape(B, H, lq_p, Dv)[:, :, :Lq]
    if not return_attention:
        return ctx
    attn = outs[1].reshape(B, H, lq_p, Lk)[:, :, :Lq]
    return ctx, attn


def reference_forward(q, k, v, scale=None, attn_mask=None):
    """Plain-JAX reference identical to the PyTorch module (eval mode)."""
    s = jnp.einsum("bhqd,bhkd->bhqk", q, k)
    if scale:
        s = s * scale
    if attn_mask is not None:
        s = jnp.where(attn_mask, -jnp.inf, s)
    attn = jax.nn.softmax(s, axis=-1)
    ctx = jnp.einsum("bhqk,bhkd->bhqd", attn, v)
    return ctx, attn


if __name__ == "__main__":
    # Small shapes consistent with the module: [B, num_heads, L, D].
    B, H, Lq, Lk, Dk, Dv = 2, 4, 8, 16, 16, 32

    root = jax.random.PRNGKey(0)
    kq, kk, kv = jax.random.split(root, 3)
    q = jax.random.normal(kq, (B, H, Lq, Dk), jnp.float32)
    k = jax.random.normal(kk, (B, H, Lk, Dk), jnp.float32)
    v = jax.random.normal(kv, (B, H, Lk, Dv), jnp.float32)
    scale = Dk ** -0.5

    # bf16 inputs + bf16 MXU path -> looser tolerance than pure-f32.
    ATOL = RTOL = 5e-2

    # --- no-mask path ---
    ctx, attn = scale_dot_product_attention(q, k, v, scale=scale)
    jax.block_until_ready((ctx, attn))
    ref_ctx, ref_attn = reference_forward(q, k, v, scale=scale)
    assert jnp.allclose(attn, ref_attn, atol=ATOL, rtol=RTOL), "attention mismatch"
    assert jnp.allclose(ctx, ref_ctx, atol=ATOL, rtol=RTOL), "context mismatch"

    # --- masked path (True == masked, like torch.masked_fill) ---
    row = jax.lax.broadcasted_iota(jnp.int32, (Lq, Lk), 0)
    col = jax.lax.broadcasted_iota(jnp.int32, (Lq, Lk), 1)
    causal_mask = jnp.broadcast_to(col > row, (B, H, Lq, Lk))
    ctx_m, attn_m = scale_dot_product_attention(
        q, k, v, scale=scale, attn_mask=causal_mask)
    jax.block_until_ready((ctx_m, attn_m))
    ref_ctx_m, ref_attn_m = reference_forward(
        q, k, v, scale=scale, attn_mask=causal_mask)
    assert jnp.allclose(attn_m, ref_attn_m, atol=ATOL, rtol=RTOL), "masked attention mismatch"
    assert jnp.allclose(ctx_m, ref_ctx_m, atol=ATOL, rtol=RTOL), "masked context mismatch"

    # --- context-only path (attention matrix not written back) ---
    ctx_only = scale_dot_product_attention(
        q, k, v, scale=scale, attn_mask=causal_mask, return_attention=False)
    jax.block_until_ready(ctx_only)
    assert jnp.allclose(ctx_only, ref_ctx_m, atol=ATOL, rtol=RTOL), "context-only mismatch"

    print("KERNEL_OK")
</pallas_src>

<mosaic_0001>
module attributes {stable_mosaic.version = 11 : i64} {
  func.func @sdpa_kernel(%arg0: i32, %arg1: i32, %arg2: memref<1x8x16xbf16, #tpu.memory_space<vmem>>, %arg3: memref<1x16x16xbf16, #tpu.memory_space<vmem>>, %arg4: memref<1x16x32xbf16, #tpu.memory_space<vmem>>, %arg5: memref<1x8x32xf32, #tpu.memory_space<vmem>>, %arg6: memref<1x8x16xf32, #tpu.memory_space<vmem>>) attributes {dimension_semantics = [#tpu.dimension_semantics<parallel>, #tpu.dimension_semantics<parallel>], iteration_bounds = array<i64: 8, 1>, scalar_prefetch = 0 : i64, scratch_operands = 0 : i64, tpu.core_type = #tpu.core_type<tc>, window_params = [{transform_indices = @transform_0, window_bounds = array<i64: 1, 8, 16>}, {transform_indices = @transform_1, window_bounds = array<i64: 1, 16, 16>}, {transform_indices = @transform_2, window_bounds = array<i64: 1, 16, 32>}, {transform_indices = @transform_3, window_bounds = array<i64: 1, 8, 32>}, {transform_indices = @transform_4, window_bounds = array<i64: 1, 8, 16>}]} {
    %c0 = arith.constant 0 : index
    %c0_0 = arith.constant 0 : index
    %c0_1 = arith.constant 0 : index
    %0 = vector.load %arg2[%c0, %c0_0, %c0_1] : memref<1x8x16xbf16, #tpu.memory_space<vmem>>, vector<1x8x16xbf16>
    %1 = vector.shape_cast %0 : vector<1x8x16xbf16> to vector<8x16xbf16>
    %cst = arith.constant 2.500000e-01 : bf16
    %2 = vector.broadcast %cst : bf16 to vector<8x16xbf16>
    %3 = arith.mulf %1, %2 : vector<8x16xbf16>
    %c0_2 = arith.constant 0 : index
    %c0_3 = arith.constant 0 : index
    %c0_4 = arith.constant 0 : index
    %4 = vector.load %arg3[%c0_2, %c0_3, %c0_4] : memref<1x16x16xbf16, #tpu.memory_space<vmem>>, vector<1x16x16xbf16>
    %5 = vector.shape_cast %4 : vector<1x16x16xbf16> to vector<16x16xbf16>
    %c0_5 = arith.constant 0 : index
    %c0_6 = arith.constant 0 : index
    %c0_7 = arith.constant 0 : index
    %6 = vector.load %arg4[%c0_5, %c0_6, %c0_7] : memref<1x16x32xbf16, #tpu.memory_space<vmem>>, vector<1x16x32xbf16>
    %7 = vector.shape_cast %6 : vector<1x16x32xbf16> to vector<16x32xbf16>
    %cst_8 = arith.constant dense<0.000000e+00> : vector<8x16xf32>
    %8 = tpu.matmul %3, %5, %cst_8 {dimension_numbers = #tpu.dot_dimension_numbers<[1], [1], [0], [0], [0, 0, 1, 0], [], []>} : vector<8x16xbf16>, vector<16x16xbf16>, vector<8x16xf32> -> vector<8x16xf32>
    %cst_9 = arith.constant dense<0xFF800000> : vector<8xf32>
    %9 = vector.multi_reduction <maximumf>, %8, %cst_9 [1] : vector<8x16xf32> to vector<8xf32>
    %10 = vector.shape_cast %9 : vector<8xf32> to vector<8x1xf32>
    %11 = vector.broadcast %10 : vector<8x1xf32> to vector<8x16xf32>
    %12 = arith.subf %8, %11 : vector<8x16xf32>
    %13 = math.exp %12 : vector<8x16xf32>
    %cst_10 = arith.constant dense<0.000000e+00> : vector<8xf32>
    %14 = vector.multi_reduction <add>, %13, %cst_10 [1] : vector<8x16xf32> to vector<8xf32>
    %15 = vector.shape_cast %14 : vector<8xf32> to vector<8x1xf32>
    %16 = tpu.reciprocal %15 {approx = true} : vector<8x1xf32> -> vector<8x1xf32>
    %17 = vector.broadcast %16 : vector<8x1xf32> to vector<8x16xf32>
    %18 = arith.mulf %13, %17 : vector<8x16xf32>
    %c0_11 = arith.constant 0 : index
    %c0_12 = arith.constant 0 : index
    %c0_13 = arith.constant 0 : index
    %19 = vector.load %arg6[%c0_11, %c0_12, %c0_13] : memref<1x8x16xf32, #tpu.memory_space<vmem>>, vector<1x8x16xf32>
    %20 = vector.shape_cast %19 : vector<1x8x16xf32> to vector<8x16xf32>
    %21 = vector.shape_cast %18 : vector<8x16xf32> to vector<1x8x16xf32>
    tpu.vector_store %arg6[%c0_11, %c0_12, %c0_13], %21 {strides = array<i32>} : memref<1x8x16xf32, #tpu.memory_space<vmem>>, vector<1x8x16xf32>,
    %22 = arith.truncf %18 : vector<8x16xf32> to vector<8x16xbf16>
    %cst_14 = arith.constant dense<0.000000e+00> : vector<8x32xf32>
    %23 = tpu.matmul %22, %7, %cst_14 {dimension_numbers = #tpu.dot_dimension_numbers<[1], [0], [0], [1], [0, 0, 1, 1], [], []>} : vector<8x16xbf16>, vector<16x32xbf16>, vector<8x32xf32> -> vector<8x32xf32>
    %c0_15 = arith.constant 0 : index
    %c0_16 = arith.constant 0 : index
    %c0_17 = arith.constant 0 : index
    %24 = vector.load %arg5[%c0_15, %c0_16, %c0_17] : memref<1x8x32xf32, #tpu.memory_space<vmem>>, vector<1x8x32xf32>
    %25 = vector.shape_cast %24 : vector<1x8x32xf32> to vector<8x32xf32>
    %26 = vector.shape_cast %23 : vector<8x32xf32> to vector<1x8x32xf32>
    tpu.vector_store %arg5[%c0_15, %c0_16, %c0_17], %26 {strides = array<i32>} : memref<1x8x32xf32, #tpu.memory_space<vmem>>, vector<1x8x32xf32>,
    return
  }
  func.func @transform_0(%arg0: i32, %arg1: i32) -> (i32, i32, i32) {
    %c0_i32 = arith.constant 0 : i32
    %c0_i32_0 = arith.constant 0 : i32
    return %arg0, %arg1, %c0_i32 : i32, i32, i32
  }
  func.func @transform_1(%arg0: i32, %arg1: i32) -> (i32, i32, i32) {
    %c0_i32 = arith.constant 0 : i32
    %c0_i32_0 = arith.constant 0 : i32
    %c0_i32_1 = arith.constant 0 : i32
    return %arg0, %c0_i32, %c0_i32_0 : i32, i32, i32
  }
  func.func @transform_2(%arg0: i32, %arg1: i32) -> (i32, i32, i32) {
    %c0_i32 = arith.constant 0 : i32
    %c0_i32_0 = arith.constant 0 : i32
    %c0_i32_1 = arith.constant 0 : i32
    return %arg0, %c0_i32, %c0_i32_0 : i32, i32, i32
  }
  func.func @transform_3(%arg0: i32, %arg1: i32) -> (i32, i32, i32) {
    %c0_i32 = arith.constant 0 : i32
    %c0_i32_0 = arith.constant 0 : i32
    return %arg0, %arg1, %c0_i32 : i32, i32, i32
  }
  func.func @transform_4(%arg0: i32, %arg1: i32) -> (i32, i32, i32) {
    %c0_i32 = arith.constant 0 : i32
    %c0_i32_0 = arith.constant 0 : i32
    return %arg0, %arg1, %c0_i32 : i32, i32, i32
  }
}

</mosaic_0001>

<llo_original>
// kernel: tpu_custom_call.1
$region0: #{tpu_custom_call.1}
  #allocation0 [shape = 'u32[]', space=smem, size = 0x4, offset = 0x4, fixed_abs, tag = 'smem constant byte address 0x4 - core index']
  #allocation1 [shape = 'u32[144,128]{1,0:T(1,128)}', space=vmem, size = 0x12000, scoped, tag = 'internal scratch']
  %s0 = inlined_call_operand.hbm [shape: bf16[8,8,16], index: 0, kind: input, shape index: {}]
  %s1 = inlined_call_operand.hbm [shape: bf16[8,16,16], index: 1, kind: input, shape index: {}]
  %s2 = inlined_call_operand.hbm [shape: bf16[8,16,32], index: 2, kind: input, shape index: {}]
  %s3 = inlined_call_operand.hbm [shape: f32[8,8,32], index: 3, kind: output, shape index: {0}]
  %s4 = inlined_call_operand.hbm [shape: f32[8,8,16], index: 4, kind: output, shape index: {1}]
  %5 = xla_tuple %s3, %s4
  %s6 = sld [smem:[#allocation0]]
  $region65: #{tpu_custom_call.1} parent=0
    _
  %s8 = ssub.s32 1, %s6
  %s9 = scalar_select 0, %s8, %s6
  $region1: #{tpu_custom_call.1} parent=0
    #allocation2 [shape = 'u8[4096]{0}', space=vmem, size = 0x1000, scoped, tag = 'input window, operand 0']
    #allocation3 [shape = 's32[2]{0}', space=sflag, size = 0x8, scoped, tag = 'scoped memory for tpu_custom_call.1']
    #allocation4 [shape = 's32[2]{0}', space=sflag, size = 0x8, scoped, tag = 'scoped memory for tpu_custom_call.1']
    #allocation5 [shape = 'u8[8192]{0}', space=vmem, size = 0x2000, scoped, tag = 'input window, operand 1']
    #allocation6 [shape = 's32[2]{0}', space=sflag, size = 0x8, scoped, tag = 'scoped memory for tpu_custom_call.1']
    #allocation7 [shape = 'u8[8192]{0}', space=vmem, size = 0x2000, scoped, tag = 'input window, operand 2']
    #allocation8 [shape = 'u8[8192]{0}', space=vmem, size = 0x2000, scoped, tag = 'output window, operand 0']
    #allocation9 [shape = 'u8[8192]{0}', space=vmem, size = 0x2000, scoped, tag = 'output window, operand 1']
    #allocation10 [shape = 's32[2]{0}', space=sflag, size = 0x8, scoped, tag = 'scoped memory for tpu_custom_call.1']
    %10 = vsyncpa [#allocation3], 0
    %s11 = scalar_lea.sflag [#allocation3], 1
    %12 = vsyncpa %s11, 0
    %13 = vsyncpa [#allocation6], 0
    %s14 = scalar_lea.sflag [#allocation6], 1
    %15 = vsyncpa %s14, 0
    %16 = vsyncpa [#allocation4], 0
    %s17 = scalar_lea.sflag [#allocation4], 1
    %18 = vsyncpa %s17, 0
    %19 = vsyncpa [#allocation10], 0
    %s20 = scalar_lea.sflag [#allocation10], 1
    %21 = vsyncpa %s20, 0
    loop: start=0, step=1, limit=10
    $region2: #{tpu_custom_call.1} parent=1 // loop_pre_header
      _
    $region3: #{tpu_custom_call.1} parent=1 // loop_header
      %s23 = sphi 0, %s27
      %p24 = scmp.ge.s32.totalorder %s23, 10
      %s30 = sphi 0, %s42
      %s31 = sphi 0, %s38
      %s32 = sphi 0, %s30
      %s33 = sphi 0, %s31
      %s34 = sphi 0, %s32
      %s35 = sphi 0, %s33
      %s47 = sphi 0, %s49
      %s50 = sphi 0, %s47
      %s51 = sphi 0, %s50
      %s67 = sphi 0, %s51
      %s73 = sphi 0, %s75
      %s76 = sphi 0, %s73
      %s77 = sphi 0, %s76
      %s93 = sphi 0, %s77
      %s99 = sphi 0, %s101
      %s102 = sphi 0, %s99
      %s103 = sphi 0, %s102
      %s119 = sphi 0, %s103
      %s127 = sphi 0, %s129
      %s130 = sphi 0, %s127
      %s131 = sphi 0, %s130
      %s147 = sphi 0, %s131
      %s155 = sphi 0, %s157
      %s158 = sphi 0, %s155
      %s159 = sphi 0, %s158
      %s175 = sphi 0, %s159
    $region4: #{tpu_custom_call.1} parent=1 // loop_header_branch
      %26 = sbr.rel (%p24) target = $region8
    $region5: #{tpu_custom_call.1} parent=1 // loop_body
      %s28 = ssub.s32 %s23, 1
      %s29 = ssub.s32 %s23, 2
      %s36 = sadd.s32 1, %s31
      %p37 = scmp.ge.s32.totalorder %s36, 1
      %s38 = scalar_select %p37, 0, %s36
      %s39 = sadd.s32 1, %s30
      %s40 = scalar_select %p37, %s39, %s30
      %p41 = scmp.ge.s32.totalorder %s40, 8
      %s42 = scalar_select %p41, 0, %s40
      %s43 = ssub.s32 %s30, %s42
      %s44 = ssub.s32 %s31, %s38
      %s45 = sor.u32 %s43, %s44
      %p46 = scmp.eq.s32.totalorder %s45, 0
      %s48 = sadd.s32 %s47, 1
      %s49 = scalar_select %p46, %s47, %s48
      %p52 = pneg %p46
      %p53 = scmp.eq.s32.totalorder %s23, 7
      %p54 = por %p52, %p53
      %p55 = scmp.ne.s32.totalorder %s47, %s50
      %p56 = scmp.eq.s32.totalorder %s23, 0
      %p57 = por %p55, %p56
      %p58 = scmp.ne.s32.totalorder %s47, %s50
      %p59 = scmp.eq.s32.totalorder %s28, 7
      %p60 = por %p58, %p59
      %p61 = scmp.ne.s32.totalorder %s50, %s51
      %p62 = scmp.eq.s32.totalorder %s28, 0
      %p63 = por %p61, %p62
      %p64 = scmp.ne.s32.totalorder %s50, %s51
      %p65 = scmp.eq.s32.totalorder %s29, 7
      %p66 = por %p64, %p65
      %p68 = scmp.ne.s32.totalorder %s51, %s67
      %p69 = scmp.eq.s32.totalorder %s29, 0
      %p70 = por %p68, %p69
      %s71 = ssub.s32 %s30, %s42
      %p72 = scmp.eq.s32.totalorder %s71, 0
      %s74 = sadd.s32 %s73, 1
      %s75 = scalar_select %p72, %s73, %s74
      %p78 = pneg %p72
      %p79 = scmp.eq.s32.totalorder %s23, 7
      %p80 = por %p78, %p79
      %p81 = scmp.ne.s32.totalorder %s73, %s76
      %p82 = scmp.eq.s32.totalorder %s23, 0
      %p83 = por %p81, %p82
      %p84 = scmp.ne.s32.totalorder %s73, %s76
      %p85 = scmp.eq.s32.totalorder %s28, 7
      %p86 = por %p84, %p85
      %p87 = scmp.ne.s32.totalorder %s76, %s77
      %p88 = scmp.eq.s32.totalorder %s28, 0
      %p89 = por %p87, %p88
      %p90 = scmp.ne.s32.totalorder %s76, %s77
      %p91 = scmp.eq.s32.totalorder %s29, 7
      %p92 = por %p90, %p91
      %p94 = scmp.ne.s32.totalorder %s77, %s93
      %p95 = scmp.eq.s32.totalorder %s29, 0
      %p96 = por %p94, %p95
      %s97 = ssub.s32 %s30, %s42
      %p98 = scmp.eq.s32.totalorder %s97, 0
      %s100 = sadd.s32 %s99, 1
      %s101 = scalar_select %p98, %s99, %s100
      %p104 = pneg %p98
      %p105 = scmp.eq.s32.totalorder %s23, 7
      %p106 = por %p104, %p105
      %p107 = scmp.ne.s32.totalorder %s99, %s102
      %p108 = scmp.eq.s32.totalorder %s23, 0
      %p109 = por %p107, %p108
      %p110 = scmp.ne.s32.totalorder %s99, %s102
      %p111 = scmp.eq.s32.totalorder %s28, 7
      %p112 = por %p110, %p111
      %p113 = scmp.ne.s32.totalorder %s102, %s103
      %p114 = scmp.eq.s32.totalorder %s28, 0
      %p115 = por %p113, %p114
      %p116 = scmp.ne.s32.totalorder %s102, %s103
      %p117 = scmp.eq.s32.totalorder %s29, 7
      %p118 = por %p116, %p117
      %p120 = scmp.ne.s32.totalorder %s103, %s119
      %p121 = scmp.eq.s32.totalorder %s29, 0
      %p122 = por %p120, %p121
      %s123 = ssub.s32 %s30, %s42
      %s124 = ssub.s32 %s31, %s38
      %s125 = sor.u32 %s123, %s124
      %p126 = scmp.eq.s32.totalorder %s125, 0
      %s128 = sadd.s32 %s127, 1
      %s129 = scalar_select %p126, %s127, %s128
      %p132 = pneg %p126
      %p133 = scmp.eq.s32.totalorder %s23, 7
      %p134 = por %p132, %p133
      %p135 = scmp.ne.s32.totalorder %s127, %s130
      %p136 = scmp.eq.s32.totalorder %s23, 0
      %p137 = por %p135, %p136
      %p138 = scmp.ne.s32.totalorder %s127, %s130
      %p139 = scmp.eq.s32.totalorder %s28, 7
      %p140 = por %p138, %p139
      %p141 = scmp.ne.s32.totalorder %s130, %s131
      %p142 = scmp.eq.s32.totalorder %s28, 0
      %p143 = por %p141, %p142
      %p144 = scmp.ne.s32.totalorder %s130, %s131
      %p145 = scmp.eq.s32.totalorder %s29, 7
      %p146 = por %p144, %p145
      %p148 = scmp.ne.s32.totalorder %s131, %s147
      %p149 = scmp.eq.s32.totalorder %s29, 0
      %p150 = por %p148, %p149
      %s151 = ssub.s32 %s30, %s42
      %s152 = ssub.s32 %s31, %s38
      %s153 = sor.u32 %s151, %s152
      %p154 = scmp.eq.s32.totalorder %s153, 0
      %s156 = sadd.s32 %s155, 1
      %s157 = scalar_select %p154, %s155, %s156
      %p160 = pneg %p154
      %p161 = scmp.eq.s32.totalorder %s23, 7
      %p162 = por %p160, %p161
      %p163 = scmp.ne.s32.totalorder %s155, %s158
      %p164 = scmp.eq.s32.totalorder %s23, 0
      %p165 = por %p163, %p164
      %p166 = scmp.ne.s32.totalorder %s155, %s158
      %p167 = scmp.eq.s32.totalorder %s28, 7
      %p168 = por %p166, %p167
      %p169 = scmp.ne.s32.totalorder %s158, %s159
      %p170 = scmp.eq.s32.totalorder %s28, 0
      %p171 = por %p169, %p170
      %p172 = scmp.ne.s32.totalorder %s158, %s159
      %p173 = scmp.eq.s32.totalorder %s29, 7
      %p174 = por %p172, %p173
      %p176 = scmp.ne.s32.totalorder %s159, %s175
      %p177 = scmp.eq.s32.totalorder %s29, 0
      %p178 = por %p176, %p177
      %p179 = scmp.le.s32.totalorder 1, %s23
      %p180 = scmp.lt.s32.totalorder %s23, 9
      %p181 = pnand %p179, %p180
      %p182 = pneg %p181
      // Predicated region
      $region9: #{tpu_custom_call.1} parent=5 // pred_check
        _
      $region10: #{tpu_custom_call.1} parent=5 // pred_check_branch
        %184 = sbr.rel (%p181) target = $region12
      $region11: #{tpu_custom_call.1} parent=5 // pred_region
        %s185 = ssub.s32 %s23, 1
      $region12: #{tpu_custom_call.1} parent=5 // pred_fallthru
        _
      %p186 = scmp.lt.s32.totalorder %s23, 8
      // Predicated region
      $region13: #{tpu_custom_call.1} parent=5 // pred_check
        %p187 = pneg %p186
      $region14: #{tpu_custom_call.1} parent=5 // pred_check_branch
        %189 = sbr.rel (%p187) target = $region16
      $region15: #{tpu_custom_call.1} parent=5 // pred_region
        // Predicated region
        $region17: #{tpu_custom_call.1} parent=15 // pred_check
          %p190 = pneg %p57
        $region18: #{tpu_custom_call.1} parent=15 // pred_check_branch
          %192 = sbr.rel (%p190) target = $region20
        $region19: #{tpu_custom_call.1} parent=15 // pred_region
          %s193 = sand.u32 %s47, 1
          %s194 = scalar_lea.sflag [#allocation3], %s193
          %s195 = sand.u32 %s47, 1
          %s196 = smul.addr %s195, 4
          %s197 = scalar_lea.vmem [#allocation2], %s196
          %s199 = ssub.s32 64, 64
          %200 = vsyncadd %s194, %s199
          %s201 = sadd.s32 %s31, %s30
          %s202 = smul.addr %s201, 64
          %s203 = scalar_lea.hbm %s0, %s202
          %s205 = sshll.u32 %s197, 4
          %s206 = int_to_ptr.vmem [resolvable:$true] %s205
          %208 = dma.hbm_to_vmem [thread:$0]  %s203, 64, %s206, %s194
        $region20: #{tpu_custom_call.1} parent=15 // pred_fallthru
          _
        // Predicated region
        $region21: #{tpu_custom_call.1} parent=15 // pred_check
          %p209 = pneg %p83
        $region22: #{tpu_custom_call.1} parent=15 // pred_check_branch
          %211 = sbr.rel (%p209) target = $region24
        $region23: #{tpu_custom_call.1} parent=15 // pred_region
          %s212 = sand.u32 %s23, 1
          %s213 = scalar_lea.sflag [#allocation6], %s212
          %s214 = sand.u32 %s73, 1
          %s215 = smul.addr %s214, 8
          %s216 = scalar_lea.vmem [#allocation5], %s215
          %s218 = ssub.s32 128, 128
          %219 = vsyncadd %s213, %s218
          %s220 = smul.addr %s30, 2
          %s221 = smul.addr %s220, 64
          %s222 = scalar_lea.hbm %s1, %s221
          %s223 = sshll.u32 %s216, 4
          %s224 = int_to_ptr.vmem [resolvable:$true] %s223
          %229 = dma.hbm_to_vmem [thread:$0]  %s222, 128, %s224, %s213, 64, 64, 4
        $region24: #{tpu_custom_call.1} parent=15 // pred_fallthru
          _
        // Predicated region
        $region25: #{tpu_custom_call.1} parent=15 // pred_check
          %p230 = pneg %p109
        $region26: #{tpu_custom_call.1} parent=15 // pred_check_branch
          %232 = sbr.rel (%p230) target = $region28
        $region27: #{tpu_custom_call.1} parent=15 // pred_region
          %s233 = sand.u32 %s23, 1
          %s234 = scalar_lea.sflag [#allocation6], %s233
          %s235 = sand.u32 %s99, 1
          %s236 = smul.addr %s235, 8
          %s237 = scalar_lea.vmem [#allocation7], %s236
          %s239 = ssub.s32 128, 128
          %240 = vsyncadd %s234, %s239
          %s241 = smul.addr %s30, 2
          %s242 = smul.addr %s241, 64
          %s243 = scalar_lea.hbm %s2, %s242
          %s244 = sshll.u32 %s237, 4
          %s245 = int_to_ptr.vmem [resolvable:$true] %s244
          %250 = dma.hbm_to_vmem [thread:$0]  %s243, 128, %s245, %s234, 64, 64, 4
        $region28: #{tpu_custom_call.1} parent=15 // pred_fallthru
          _
      $region16: #{tpu_custom_call.1} parent=5 // pred_fallthru
        _
      %p251 = scmp.le.s32.totalorder 1, %s23
      %p252 = scmp.lt.s32.totalorder %s23, 9
      %p253 = pnand %p251, %p252
      %p254 = pneg %p253
      // Predicated region
      $region29: #{tpu_custom_call.1} parent=5 // pred_check
        _
      $region30: #{tpu_custom_call.1} parent=5 // pred_check_branch
        %256 = sbr.rel (%p253) target = $region32
      $region31: #{tpu_custom_call.1} parent=5 // pred_region
        %s257 = ssub.s32 %s23, 1
        %s258 = sand.u32 %s50, 1
        %s259 = scalar_lea.sflag [#allocation3], %s258
        %s260 = sand.u32 %s50, 1
        %s261 = smul.addr %s260, 4
        %s262 = scalar_lea.vmem [#allocation2], %s261
        // Predicated region
        $region33: #{tpu_custom_call.1} parent=31 // pred_check
          %p263 = pneg %p63
        $region34: #{tpu_custom_call.1} parent=31 // pred_check_branch
          %265 = sbr.rel (%p263) target = $region36
        $region35: #{tpu_custom_call.1} parent=31 // pred_region
          %266 = dma.done %s259, 64
        $region36: #{tpu_custom_call.1} parent=31 // pred_fallthru
          _
        %s267 = sand.u32 %s28, 1
        %s268 = scalar_lea.sflag [#allocation6], %s267
        %s269 = sand.u32 %s76, 1
        %s270 = smul.addr %s269, 8
        %s271 = scalar_lea.vmem [#allocation5], %s270
        // Predicated region
        $region37: #{tpu_custom_call.1} parent=31 // pred_check
          %p272 = pneg %p89
        $region38: #{tpu_custom_call.1} parent=31 // pred_check_branch
          %274 = sbr.rel (%p272) target = $region40
        $region39: #{tpu_custom_call.1} parent=31 // pred_region
          %275 = dma.done %s268, 128
        $region40: #{tpu_custom_call.1} parent=31 // pred_fallthru
          _
        %s276 = sand.u32 %s28, 1
        %s277 = scalar_lea.sflag [#allocation6], %s276
        %s278 = sand.u32 %s102, 1
        %s279 = smul.addr %s278, 8
        %s280 = scalar_lea.vmem [#allocation7], %s279
        // Predicated region
        $region41: #{tpu_custom_call.1} parent=31 // pred_check
          %p281 = pneg %p115
        $region42: #{tpu_custom_call.1} parent=31 // pred_check_branch
          %283 = sbr.rel (%p281) target = $region44
        $region43: #{tpu_custom_call.1} parent=31 // pred_region
          %284 = dma.done %s277, 128
        $region44: #{tpu_custom_call.1} parent=31 // pred_fallthru
          _
        %s285 = sand.u32 %s50, 1
        %s286 = scalar_lea.sflag [#allocation3], %s285
        %s287 = sand.u32 %s50, 1
        %s288 = smul.addr %s287, 4
        %s289 = scalar_lea.vmem [#allocation2], %s288
        %p290 = pneg %p63
        %p291 = pneg %p60
        %s292 = sand.u32 %s28, 1
        %s293 = scalar_lea.sflag [#allocation6], %s292
        %s294 = sand.u32 %s76, 1
        %s295 = smul.addr %s294, 8
        %s296 = scalar_lea.vmem [#allocation5], %s295
        %p297 = pneg %p89
        %p298 = pneg %p86
        %s299 = sand.u32 %s28, 1
        %s300 = scalar_lea.sflag [#allocation6], %s299
        %s301 = sand.u32 %s102, 1
        %s302 = smul.addr %s301, 8
        %s303 = scalar_lea.vmem [#allocation7], %s302
        %p304 = pneg %p115
        %p305 = pneg %p112
        %p306 = pneg %p143
        %p307 = pneg %p140
        %s308 = sand.u32 %s130, 1
        %s309 = scalar_lea.sflag [#allocation4], %s308
        %s310 = sand.u32 %s130, 1
        %s311 = smul.addr %s310, 8
        %s312 = scalar_lea.vmem [#allocation8], %s311
        %p313 = pneg %p171
        %p314 = pneg %p168
        %s315 = sand.u32 %s158, 1
        %s316 = scalar_lea.sflag [#allocation10], %s315
        %s317 = sand.u32 %s158, 1
        %s318 = smul.addr %s317, 8
        %s319 = scalar_lea.vmem [#allocation9], %s318
        %v322 = vld [vmem:[%s262] sm:$0xf]
        %v323 = vmul.bf16 %v322, 1048592000
        %v324 = vld [vmem:[%s271] sm:$0xf]
        %v325 = vld [vmem:[%s271 + $0x4] sm:$0xf]
        %v326 = vld [vmem:[%s280] sm:$0xf]
        %v327 = vld [vmem:[%s280 + $0x4] sm:$0xf]
        %v330 = vunpack.c.l.b16 %v324
        %v331 = vunpack.c.l.b16 %v325
        %v332 = vpack.c.b16 %v331, %v330
        %vm333 = vcmask 130048
        %v335 = vsel %vm333, %v323, 0
        %v338 = vsel %vm333, %v332, 0
        %340 = vmatprep.subr.bf16.mxu0 0
        %341 = vmatpush1.bf16.xpose.msra.mxu0 0
        %342 = vmatprep.subr.bf16.mxu0 0
        %343 = vmatpush1.bf16.xpose.msra.mxu0 0
        %344 = vmatprep.subr.bf16.mxu0 0
        %345 = vmatpush1.bf16.xpose.msra.mxu0 0
        %346 = vmatprep.subr.bf16.mxu0 0
        %347 = vmatpush1.bf16.xpose.msra.mxu0 0
        %348 = vmatprep.subr.bf16.mxu0 0
        %349 = vmatpush1.bf16.xpose.msra.mxu0 0
        %350 = vmatprep.subr.bf16.mxu0 0
        %351 = vmatpush1.bf16.xpose.msra.mxu0 0
        %352 = vmatprep.subr.bf16.mxu0 0
        %353 = vmatpush1.bf16.xpose.msra.mxu0 0
        %354 = vmatprep.subr.bf16.mxu0 0
        %355 = vmatpush1.bf16.xpose.msra.mxu0 %v338
        %356 = vmatprep.subr.bf16.mxu0 0
        %357 = vmatpush2.bf16.xpose.msra.mxu0 0
        %358 = vmatprep.subr.bf16.mxu0 0
        %359 = vmatpush2.bf16.xpose.msra.mxu0 0
        %360 = vmatprep.subr.bf16.mxu0 0
        %361 = vmatpush2.bf16.xpose.msra.mxu0 0
        %362 = vmatprep.subr.bf16.mxu0 0
        %363 = vmatpush2.bf16.xpose.msra.mxu0 0
        %364 = vmatprep.subr.bf16.mxu0 0
        %365 = vmatpush2.bf16.xpose.msra.mxu0 0
        %366 = vmatprep.subr.bf16.mxu0 0
        %367 = vmatpush2.bf16.xpose.msra.mxu0 0
        %368 = vmatprep.subr.bf16.mxu0 0
        %369 = vmatpush2.bf16.xpose.msra.mxu0 0
        %370 = vmatprep.subr.bf16.mxu0 0
        %371 = vmatpush2.bf16.xpose.msra.mxu0 0
        %372 = vmatprep.mubr.bf16.mxu0 0
        %373 = vmatmul.mubr.bf16.gmra.mxu0 %v335
        %v374 = vpop.f32.mrf.mxu0
        %v375 = vadd.f32 0.0, %v374
        %v376 = vpop.f32.mrf.mxu0
        %v377 = vpop.f32.mrf.mxu0
        %v378 = vpop.f32.mrf.mxu0
        %379 = vdwg.mxu0
        %v380 = vsel %vm333, %v375, -inf
        %381 = vmax.xlane.f32.xlu0 %v380
        %v382 = vpop.xlane.xlu0 %381
        %v383 = vsub.f32 %v375, %v382
        %v384 = vmul.f32 %v383, 1.442695
        %v385 = vpow.pop %v384
        %v386 = vsel %vm333, %v385, 0.0
        %387 = vadd.xlane.f32.xlu0 %v386
        %v388 = vpop.xlane.xlu0 %387
        %v389 = vrcp.pop %v388
        %v390 = vmul.f32 %v385, %v389
        %391 = vst.msk [vmem:[%s319] sm:$0xff] %vm333, %v390
        %v392 = vpack.c.bf16 %v390, %v390
        %v395 = vunpack.c.l.b16 %v326
        %v396 = vunpack.c.l.b16 %v327
        %v397 = vpack.c.b16 %v396, %v395
        %v400 = vsel %vm333, %v392, 0
        %402 = vmatprep.subr.bf16.mxu0 0
        %403 = vmatpush1.bf16.msra.mxu0 0
        %404 = vmatprep.subr.bf16.mxu0 0
        %405 = vmatpush1.bf16.msra.mxu0 0
        %406 = vmatprep.subr.bf16.mxu0 0
        %407 = vmatpush1.bf16.msra.mxu0 0
        %408 = vmatprep.subr.bf16.mxu0 0
        %409 = vmatpush1.bf16.msra.mxu0 0
        %410 = vmatprep.subr.bf16.mxu0 0
        %411 = vmatpush1.bf16.msra.mxu0 0
        %412 = vmatprep.subr.bf16.mxu0 0
        %413 = vmatpush1.bf16.msra.mxu0 0
        %414 = vmatprep.subr.bf16.mxu0 0
        %415 = vmatpush1.bf16.msra.mxu0 0
        %416 = vmatprep.subr.bf16.mxu0 0
        %417 = vmatpush1.bf16.msra.mxu0 %v397
        %418 = vmatprep.subr.bf16.mxu0 0
        %419 = vmatpush2.bf16.msra.mxu0 0
        %420 = vmatprep.subr.bf16.mxu0 0
        %421 = vmatpush2.bf16.msra.mxu0 0
        %422 = vmatprep.subr.bf16.mxu0 0
        %423 = vmatpush2.bf16.msra.mxu0 0
        %424 = vmatprep.subr.bf16.mxu0 0
        %425 = vmatpush2.bf16.msra.mxu0 0
        %426 = vmatprep.subr.bf16.mxu0 0
        %427 = vmatpush2.bf16.msra.mxu0 0
        %428 = vmatprep.subr.bf16.mxu0 0
        %429 = vmatpush2.bf16.msra.mxu0 0
        %430 = vmatprep.subr.bf16.mxu0 0
        %431 = vmatpush2.bf16.msra.mxu0 0
        %432 = vmatprep.subr.bf16.mxu0 0
        %433 = vmatpush2.bf16.msra.mxu0 0
        %434 = vmatprep.mubr.bf16.mxu0 0
        %435 = vmatmul.mubr.bf16.gmra.mxu0 %v400
        %v436 = vpop.f32.mrf.mxu0
        %v437 = vadd.f32 0.0, %v436
        %v438 = vpop.f32.mrf.mxu0
        %v439 = vpop.f32.mrf.mxu0
        %v440 = vpop.f32.mrf.mxu0
        %441 = vdwg.mxu0
        %vm442 = vcmask 261120
        %443 = vst.msk [vmem:[%s312] sm:$0xff] %vm442, %v437
        %s444 = sand.u32 %s130, 1
        %s445 = scalar_lea.sflag [#allocation4], %s444
        %s446 = sand.u32 %s130, 1
        %s447 = smul.addr %s446, 8
        %s448 = scalar_lea.vmem [#allocation8], %s447
        %s449 = sand.u32 %s158, 1
        %s450 = scalar_lea.sflag [#allocation10], %s449
        %s451 = sand.u32 %s158, 1
        %s452 = smul.addr %s451, 8
        %s453 = scalar_lea.vmem [#allocation9], %s452
        // Predicated region
        $region45: #{tpu_custom_call.1} parent=31 // pred_check
          %p454 = pneg %p140
        $region46: #{tpu_custom_call.1} parent=31 // pred_check_branch
          %456 = sbr.rel (%p454) target = $region48
        $region47: #{tpu_custom_call.1} parent=31 // pred_region
          %s458 = ssub.s32 128, 128
          %459 = vsyncadd %s445, %s458
          %s460 = sadd.s32 %s33, %s32
          %s461 = smul.addr %s460, 128
          %s462 = scalar_lea.hbm %s3, %s461
          %s464 = sshll.u32 %s448, 4
          %s465 = int_to_ptr.vmem [resolvable:$true] %s464
          %467 = dma.vmem_to_hbm [thread:$0]  %s465, 128, %s462, %s445
        $region48: #{tpu_custom_call.1} parent=31 // pred_fallthru
          _
        // Predicated region
        $region49: #{tpu_custom_call.1} parent=31 // pred_check
          %p468 = pneg %p168
        $region50: #{tpu_custom_call.1} parent=31 // pred_check_branch
          %470 = sbr.rel (%p468) target = $region52
        $region51: #{tpu_custom_call.1} parent=31 // pred_region
          %s472 = ssub.s32 128, 128
          %473 = vsyncadd %s450, %s472
          %s474 = sadd.s32 %s33, %s32
          %s475 = smul.addr %s474, 128
          %s476 = scalar_lea.hbm %s4, %s475
          %s478 = sshll.u32 %s453, 4
          %s479 = int_to_ptr.vmem [resolvable:$true] %s478
          %481 = dma.vmem_to_hbm [thread:$0]  %s479, 128, %s476, %s450
        $region52: #{tpu_custom_call.1} parent=31 // pred_fallthru
          _
      $region32: #{tpu_custom_call.1} parent=5 // pred_fallthru
        _
      %p482 = scmp.le.s32.totalorder 2, %s23
      // Predicated region
      $region53: #{tpu_custom_call.1} parent=5 // pred_check
        %p483 = pneg %p482
      $region54: #{tpu_custom_call.1} parent=5 // pred_check_branch
        %485 = sbr.rel (%p483) target = $region56
      $region55: #{tpu_custom_call.1} parent=5 // pred_region
        %s486 = ssub.s32 %s23, 2
        // Predicated region
        $region57: #{tpu_custom_call.1} parent=55 // pred_check
          %p487 = pneg %p146
        $region58: #{tpu_custom_call.1} parent=55 // pred_check_branch
          %489 = sbr.rel (%p487) target = $region60
        $region59: #{tpu_custom_call.1} parent=55 // pred_region
          %s490 = sand.u32 %s131, 1
          %s491 = scalar_lea.sflag [#allocation4], %s490
          %s492 = sand.u32 %s131, 1
          %s493 = smul.addr %s492, 8
          %s494 = scalar_lea.vmem [#allocation8], %s493
          %495 = dma.done %s491, 128
        $region60: #{tpu_custom_call.1} parent=55 // pred_fallthru
          _
        // Predicated region
        $region61: #{tpu_custom_call.1} parent=55 // pred_check
          %p496 = pneg %p174
        $region62: #{tpu_custom_call.1} parent=55 // pred_check_branch
          %498 = sbr.rel (%p496) target = $region64
        $region63: #{tpu_custom_call.1} parent=55 // pred_region
          %s499 = sand.u32 %s159, 1
          %s500 = scalar_lea.sflag [#allocation10], %s499
          %s501 = sand.u32 %s159, 1
          %s502 = smul.addr %s501, 8
          %s503 = scalar_lea.vmem [#allocation9], %s502
          %504 = dma.done %s500, 128
        $region64: #{tpu_custom_call.1} parent=55 // pred_fallthru
          _
      $region56: #{tpu_custom_call.1} parent=5 // pred_fallthru
        _
    $region6: #{tpu_custom_call.1} parent=1 // loop_footer
      %s27 = sadd.s32 1, %s23
    $region7: #{tpu_custom_call.1} parent=1 // loop_footer_branch
      %22 = sbr.rel target = $region3
    $region8: #{tpu_custom_call.1} parent=1 // loop_exit
      _
    %505 = vsyncpa [#allocation3], 1
    %s506 = scalar_lea.sflag [#allocation3], 1
    %507 = vsyncpa %s506, 1
    %508 = vsyncpa [#allocation6], 1
    %s509 = scalar_lea.sflag [#allocation6], 1
    %510 = vsyncpa %s509, 1
    %511 = vsyncpa [#allocation4], 1
    %s512 = scalar_lea.sflag [#allocation4], 1
    %513 = vsyncpa %s512, 1
    %514 = vsyncpa [#allocation10], 1
    %s515 = scalar_lea.sflag [#allocation10], 1
    %516 = vsyncpa %s515, 1

</llo_original>
